<compile_context>
chip_gen: v7x
topology: tpu7x:2x2x1
jax: 0.10.0
libtpu: 0.0.40
codegen_flags: <defaults>
</compile_context>

<pallas_src>
import functools

import jax
import jax.numpy as jnp
from jax.experimental import pallas as pl
from jax.experimental.pallas import tpu as pltpu


def _round_up(x, m):
    return ((x + m - 1) // m) * m


def _vmem_capacity_bytes():
    """Physical per-core VMEM, with a conservative (v7x, 64 MiB) fallback."""
    try:
        info = pltpu.get_tpu_info()
        cap = getattr(info, "vmem_capacity_bytes", None)
        if cap:
            return int(cap)
    except Exception:
        pass
    return 64 * 1024 * 1024


def _choose_tiles(rows, hw, dtype, vmem_cap):
    """Pick (TM, TL): dtype-aware sublane multiple, lane multiple of 128,
    about `tile_budget` bytes of x per tile. Never larger than the
    8/128-rounded extents (no tile-multiple padding of the problem)."""
    itemsize = jnp.dtype(dtype).itemsize
    # minimum sublane tile: 8 (f32) / 16 (bf16/f16) / 32 (int8/fp8)
    min_sub = max(8, 32 // itemsize)

    # generation-aware budget: ~8 MiB of x/tile when VMEM is 64 MiB (v7x),
    # ~16 MiB where 128 MiB VMEM gives headroom (v5e/v6e).
    tile_budget = (16 * 1024 * 1024 if vmem_cap >= 100 * 1024 * 1024
                   else 8 * 1024 * 1024)

    tm = min(_round_up(rows, min_sub), 512)          # 512 is a multiple of 8/16/32
    lanes_needed = _round_up(hw, 128)
    max_tl = max(128, (tile_budget // (tm * itemsize)) // 128 * 128)
    tl = min(lanes_needed, max_tl)
    return tm, tl


def _binarize_attn_kernel(w_ref, x_ref, o_ref, *, alpha, t, is_training):
    # w_ref block: (TM, 1)  -- per-row (i.e. per (n, c)) raw weight column
    # x_ref block: (TM, TL) -- lane-dense slab of spatial values
    w = w_ref[...]
    indicator = jnp.where(jnp.abs(w) < t, jnp.zeros_like(w), jnp.ones_like(w))
    if is_training:
        bw = alpha * indicator + (1.0 - alpha) * w
    else:
        bw = indicator
    # (TM, 1) * (TM, TL): lane-broadcast multiply on the VPU (free under the DMA).
    o_ref[...] = (bw * x_ref[...]).astype(o_ref.dtype)


def binarize_attention_ref(x, w_c11, alpha, t, is_training=True):
    """Pure-JAX reference (also used as the fused-XLA fallback path)."""
    ind = jnp.where(jnp.abs(w_c11) < t, jnp.zeros_like(w_c11), jnp.ones_like(w_c11))
    bw = alpha * ind + (1.0 - alpha) * w_c11 if is_training else ind
    return (bw[None, :, :, :] * x).astype(x.dtype)


def binarize_attention(x_nchw, weight_c11, alpha, t, is_training=True,
                       allow_xla_fallback=True, donate_x=False):
    """x_nchw: (N, C, H, W); weight_c11: (C, 1, 1). Returns Binarize(w) * x."""
    N, C, H, W = x_nchw.shape
    HW = H * W
    R = N * C

    itemsize = jnp.dtype(x_nchw.dtype).itemsize
    vmem_cap = _vmem_capacity_bytes()
    TM, TL = _choose_tiles(R, HW, x_nchw.dtype, vmem_cap)
    grid = (pl.cdiv(R, TM), pl.cdiv(HW, TL))

    # Degenerate single-block grid: the fixed pallas_call/pipeline overhead
    # dominates a trivially mem-bound multiply (and a 1-block grid can't be
    # split across TensorCores); let XLA fuse it instead.
    if allow_xla_fallback and grid[0] * grid[1] <= 1:
        return binarize_attention_ref(x_nchw, weight_c11, alpha, t, is_training)

    # Free views; no padding, no output slice (cdiv grid + masked ragged blocks).
    x2 = x_nchw.reshape(R, HW)
    # One weight scalar per (n, c) row; tiny (R, 1) column built once.
    w_rows = (jnp.broadcast_to(weight_c11.reshape(1, C), (N, C))
              .reshape(R, 1).astype(x_nchw.dtype))

    kernel = functools.partial(
        _binarize_attn_kernel,
        alpha=float(alpha), t=float(t), is_training=bool(is_training),
    )

    # VMEM working set: double-buffered x tile + double-buffered out tile
    # (+ tiny weight column + compiler scratch margin).  Keep headroom below
    # physical VMEM (critical on v7x where 64 MiB is the whole per-TC VMEM).
    tile_bytes = TM * TL * itemsize
    vmem_limit = int(min(4 * tile_bytes + 8 * 1024 * 1024,
                         vmem_cap - 16 * 1024 * 1024))

    out = pl.pallas_call(
        kernel,
        out_shape=jax.ShapeDtypeStruct((R, HW), x_nchw.dtype),
        grid_spec=pltpu.PrefetchScalarGridSpec(
            num_scalar_prefetch=0,
            grid=grid,  # rows outer, lanes inner: weight block const along j => no re-DMA
            in_specs=[
                pl.BlockSpec((TM, 1), lambda i, j: (i, 0)),   # per-row weight column
                pl.BlockSpec((TM, TL), lambda i, j: (i, j)),  # lane-dense x tile
            ],
            out_specs=pl.BlockSpec((TM, TL), lambda i, j: (i, j)),
        ),
        compiler_params=pltpu.CompilerParams(
            dimension_semantics=("parallel", "parallel"),
            vmem_limit_bytes=vmem_limit,
        ),
        # Optional donation of x to the output: halves HBM footprint when the
        # caller no longer needs x (off by default).
        input_output_aliases=({1: 0} if donate_x else {}),
    )(w_rows, x2)

    return out.reshape(N, C, H, W)


# TODO(synk): the PyTorch module's weight.org stashing / in-place weight.data
# mutation and the .cuda() move are host-side training bookkeeping with no
# Pallas equivalent; only the forward math (Binarize(weight) * x) is translated.


if __name__ == "__main__":
    key = jax.random.PRNGKey(0)
    kx, kw = jax.random.split(key)

    alpha, t = 0.7, 0.5

    # Small module-consistent shapes: batch=2, channels=4, spatial=16.
    N, C, H, W = 2, 4, 16, 16
    x = jax.random.normal(kx, (N, C, H, W), dtype=jnp.float32)
    weight = jax.random.normal(kw, (C, 1, 1), dtype=jnp.float32)  # torch.randn(inplanes,1,1)

    # Force the Pallas path (this small shape is a single full block) so the
    # kernel itself is exercised; by default such shapes take the XLA fallback.
    out = jax.block_until_ready(
        binarize_attention(x, weight, alpha, t, is_training=True,
                           allow_xla_fallback=False))
    ref = binarize_attention_ref(x, weight, alpha, t, is_training=True)
    assert out.shape == (N, C, H, W)
    assert out.dtype == jnp.float32
    assert jnp.allclose(out, ref, atol=1e-6, rtol=1e-6), "mismatch vs reference"

    # eval-mode semantics
    out_eval = jax.block_until_ready(
        binarize_attention(x, weight, alpha, t, is_training=False,
                           allow_xla_fallback=False))
    ref_eval = binarize_attention_ref(x, weight, alpha, t, is_training=False)
    assert jnp.allclose(out_eval, ref_eval, atol=1e-6, rtol=1e-6)

    # Ragged case: non-128-aligned spatial (14x14) and odd channel count.
    # Exercises masked partial blocks with NO wrapper pad and NO output slice.
    x2 = jax.random.normal(kx, (2, 5, 14, 14), dtype=jnp.float32)
    w2 = jax.random.normal(kw, (5, 1, 1), dtype=jnp.float32)
    out2 = jax.block_until_ready(
        binarize_attention(x2, w2, alpha, t, is_training=True,
                           allow_xla_fallback=False))
    ref2 = binarize_attention_ref(x2, w2, alpha, t, is_training=True)
    assert jnp.allclose(out2, ref2, atol=1e-6, rtol=1e-6), "mismatch (ragged case)"

    # Multi-block grid with a partial last row-block (600 rows, row tile 512),
    # taking the default dispatch path (Pallas, both axes parallel).
    x3 = jax.random.normal(kx, (2, 300, 16, 16), dtype=jnp.float32)
    w3 = jax.random.normal(kw, (300, 1, 1), dtype=jnp.float32)
    out3 = jax.block_until_ready(
        binarize_attention(x3, w3, alpha, t, is_training=True))
    ref3 = binarize_attention_ref(x3, w3, alpha, t, is_training=True)
    assert jnp.allclose(out3, ref3, atol=1e-6, rtol=1e-6), "mismatch (multi-block case)"

    print("KERNEL_OK")
</pallas_src>

<mosaic_0001>
module attributes {stable_mosaic.version = 11 : i64} {
  func.func @_binarize_attn_kernel(%arg0: i32, %arg1: i32, %arg2: memref<8x1xf32, #tpu.memory_space<vmem>>, %arg3: memref<8x256xf32, #tpu.memory_space<vmem>>, %arg4: memref<8x256xf32, #tpu.memory_space<vmem>>) attributes {dimension_semantics = [#tpu.dimension_semantics<parallel>, #tpu.dimension_semantics<parallel>], iteration_bounds = array<i64: 1, 1>, scalar_prefetch = 0 : i64, scratch_operands = 0 : i64, tpu.core_type = #tpu.core_type<tc>, window_params = [{transform_indices = @transform_0, window_bounds = array<i64: 8, 1>}, {transform_indices = @transform_1, window_bounds = array<i64: 8, 256>}, {transform_indices = @transform_2, window_bounds = array<i64: 8, 256>}]} {
    %c0 = arith.constant 0 : index
    %c0_0 = arith.constant 0 : index
    %0 = vector.load %arg2[%c0, %c0_0] : memref<8x1xf32, #tpu.memory_space<vmem>>, vector<8x1xf32>
    %1 = math.absf %0 : vector<8x1xf32>
    %cst = arith.constant 5.000000e-01 : f32
    %2 = vector.broadcast %cst : f32 to vector<8x1xf32>
    %3 = arith.cmpf olt, %1, %2 : vector<8x1xf32>
    %cst_1 = arith.constant 0.000000e+00 : f32
    %4 = vector.broadcast %cst_1 : f32 to vector<8x1xf32>
    %cst_2 = arith.constant 1.000000e+00 : f32
    %5 = vector.broadcast %cst_2 : f32 to vector<8x1xf32>
    %6 = arith.select %3, %4, %5 : vector<8x1xi1>, vector<8x1xf32>
    %cst_3 = arith.constant 0.699999988 : f32
    %7 = vector.broadcast %cst_3 : f32 to vector<8x1xf32>
    %8 = arith.mulf %7, %6 : vector<8x1xf32>
    %cst_4 = arith.constant 3.000000e-01 : f32
    %9 = vector.broadcast %cst_4 : f32 to vector<8x1xf32>
    %10 = arith.mulf %9, %0 : vector<8x1xf32>
    %11 = arith.addf %8, %10 : vector<8x1xf32>
    %c0_5 = arith.constant 0 : index
    %c0_6 = arith.constant 0 : index
    %12 = vector.load %arg3[%c0_5, %c0_6] : memref<8x256xf32, #tpu.memory_space<vmem>>, vector<8x256xf32>
    %13 = vector.broadcast %11 : vector<8x1xf32> to vector<8x256xf32>
    %14 = arith.mulf %13, %12 : vector<8x256xf32>
    %c0_7 = arith.constant 0 : index
    %c0_8 = arith.constant 0 : index
    %15 = vector.load %arg4[%c0_7, %c0_8] : memref<8x256xf32, #tpu.memory_space<vmem>>, vector<8x256xf32>
    tpu.vector_store %arg4[%c0_7, %c0_8], %14 {strides = array<i32>} : memref<8x256xf32, #tpu.memory_space<vmem>>, vector<8x256xf32>,
    return
  }
  func.func @transform_0(%arg0: i32, %arg1: i32) -> (i32, i32) {
    %c0_i32 = arith.constant 0 : i32
    %c0_i32_0 = arith.constant 0 : i32
    return %arg0, %c0_i32 : i32, i32
  }
  func.func @transform_1(%arg0: i32, %arg1: i32) -> (i32, i32) {
    %c0_i32 = arith.constant 0 : i32
    return %arg0, %arg1 : i32, i32
  }
  func.func @transform_2(%arg0: i32, %arg1: i32) -> (i32, i32) {
    %c0_i32 = arith.constant 0 : i32
    return %arg0, %arg1 : i32, i32
  }
}

</mosaic_0001>

<llo_original>
// kernel: tpu_custom_call.1
$region0: #{tpu_custom_call.1}
  #allocation0 [shape = 'u32[]', space=smem, size = 0x4, offset = 0x4, fixed_abs, tag = 'smem constant byte address 0x4 - core index']
  #allocation1 [shape = 'u32[144,128]{1,0:T(1,128)}', space=vmem, size = 0x12000, scoped, tag = 'internal scratch']
  %s0 = inlined_call_operand.vmem [shape: f32[8,1], index: 0, kind: input, shape index: {}]
  %s1 = inlined_call_operand.hbm [shape: f32[8,256], index: 1, kind: input, shape index: {}]
  %s2 = inlined_call_operand.hbm [shape: f32[8,256], index: 2, kind: output, shape index: {}]
  %s3 = sld [smem:[#allocation0]]
  $region22: #{tpu_custom_call.1} parent=0
    _
  %s5 = ssub.s32 1, %s3
  %s6 = scalar_select 0, %s5, %s3
  $region1: #{tpu_custom_call.1} parent=0
    #allocation2 [shape = 'u8[8192]{0}', space=vmem, size = 0x2000, scoped, tag = 'input window, operand 1, single buffered']
    #allocation3 [shape = 's32[1]{0}', space=sflag, size = 0x4, scoped, tag = 'scoped memory for tpu_custom_call.1']
    #allocation4 [shape = 's32[1]{0}', space=sflag, size = 0x4, scoped, tag = 'scoped memory for tpu_custom_call.1']
    #allocation5 [shape = 'u8[8192]{0}', space=vmem, size = 0x2000, scoped, tag = 'output window, operand 0, single buffered']
    %7 = vsyncpa [#allocation3], 0
    %8 = vsyncpa [#allocation4], 0
    // Predicated region
    $region2: #{tpu_custom_call.1} parent=1 // pred_check
      _
    $region3: #{tpu_custom_call.1} parent=1 // pred_check_branch
      %10 = sbr.rel (0) target = $region5
    $region4: #{tpu_custom_call.1} parent=1 // pred_region
      _
    $region5: #{tpu_custom_call.1} parent=1 // pred_fallthru
      _
    // Predicated region
    $region6: #{tpu_custom_call.1} parent=1 // pred_check
      _
    $region7: #{tpu_custom_call.1} parent=1 // pred_check_branch
      %12 = sbr.rel (0) target = $region9
    $region8: #{tpu_custom_call.1} parent=1 // pred_region
      %s14 = ssub.s32 256, 256
      %15 = vsyncadd [#allocation3], %s14
      %s17 = sshll.u32 [#allocation2], 4
      %s18 = int_to_ptr.vmem [resolvable:$true] %s17
      %20 = dma.hbm_to_vmem [thread:$0]  %s1, 256, %s18, [#allocation3]
    $region9: #{tpu_custom_call.1} parent=1 // pred_fallthru
      _
    // Predicated region
    $region10: #{tpu_custom_call.1} parent=1 // pred_check
      _
    $region11: #{tpu_custom_call.1} parent=1 // pred_check_branch
      %22 = sbr.rel (0) target = $region13
    $region12: #{tpu_custom_call.1} parent=1 // pred_region
      %23 = dma.done [#allocation3], 256
    $region13: #{tpu_custom_call.1} parent=1 // pred_fallthru
      _
    %v24 = vld [vmem:[%s0] sm:$0xff]
    %v25 = vand.u32 2147483647, %v24
    %vm26 = vcmp.lt.f32.partialorder %v25, 0.5
    %v27 = vsel %vm26, 0.0, 1.0
    %v28 = vmul.f32 %v27, 0.7
    %v29 = vmul.f32 %v24, 0.3
    %v30 = vadd.f32 %v28, %v29
    %v31 = vld [vmem:[#allocation2] sm:$0xff]
    %v32 = vld [vmem:[#allocation2 + $0x8] sm:$0xff]
    %34 = vset.pattern.permute.xlu0 0
    %35 = vperm.xlu0 %34, %v30
    %v36 = vpop.permute.xlu0 %35
    %v38 = vmul.f32 %v36, %v31
    %v39 = vmul.f32 %v36, %v32
    %40 = vst [vmem:[#allocation5] sm:$0xff] %v38
    %41 = vst [vmem:[#allocation5 + $0x8] sm:$0xff] %v39
    // Predicated region
    $region14: #{tpu_custom_call.1} parent=1 // pred_check
      _
    $region15: #{tpu_custom_call.1} parent=1 // pred_check_branch
      %43 = sbr.rel (0) target = $region17
    $region16: #{tpu_custom_call.1} parent=1 // pred_region
      %s45 = ssub.s32 256, 256
      %46 = vsyncadd [#allocation4], %s45
      %s48 = sshll.u32 [#allocation5], 4
      %s49 = int_to_ptr.vmem [resolvable:$true] %s48
      %51 = dma.vmem_to_hbm [thread:$0]  %s49, 256, %s2, [#allocation4]
    $region17: #{tpu_custom_call.1} parent=1 // pred_fallthru
      _
    // Predicated region
    $region18: #{tpu_custom_call.1} parent=1 // pred_check
      _
    $region19: #{tpu_custom_call.1} parent=1 // pred_check_branch
      %53 = sbr.rel (0) target = $region21
    $region20: #{tpu_custom_call.1} parent=1 // pred_region
      %54 = dma.done [#allocation4], 256
    $region21: #{tpu_custom_call.1} parent=1 // pred_fallthru
      _
    %55 = vsyncpa [#allocation3], 1
    %56 = vsyncpa [#allocation4], 1

</llo_original>
